<compile_context>
chip_gen: v6e
topology: v6e:2x2x1
jax: 0.10.0
libtpu: 0.0.40
codegen_flags: <defaults>
</compile_context>

<pallas_src>
import jax
import jax.numpy as jnp
import numpy as np
from jax.experimental import pallas as pl
from jax.experimental.pallas import tpu as pltpu

# ---------------------------------------------------------------------------
# Config (mirrors the module's args)
# ---------------------------------------------------------------------------
META_UNITS = (("user", 10), ("item", 12))   # args.meta_units
ATTRIBUTE_DIM = 8                           # args.attribute_dim
KEY_QUERY_SIZE = 16                         # args.key_query_size
NUM_BASES = 4                               # args.num_bases
STATE_SIZE = 32                             # args.state_size
NUM_LABELS = 16                             # args.num_labels
N_SAMPLES = 4                               # args.eval_n_samples (eval mode)
BATCH = 16

NUM_USER = META_UNITS[0][1]
NUM_ITEM = META_UNITS[1][1]
ONE_HOT_DIM = NUM_USER + NUM_ITEM + 1       # +1 constant-1 column folds b1

# Packed parameter slab layout (each section starts on an 8-row boundary;
# lane width = NB*L = 64 so wb_flat fits exactly).
ROW_M1 = 0                                   # M1    [ONE_HOT_DIM, H]  rows  0..22
ROW_W2 = 24                                  # W2aug [H+1, 2*NB]       rows 24..40
ROW_WB = 48                                  # wbf   [K, NB*L]         rows 48..79
SLAB_ROWS = ROW_WB + STATE_SIZE              # 80
SLAB_COLS = NUM_BASES * NUM_LABELS           # 64


# ---------------------------------------------------------------------------
# Fused kernel: one-hot -> (emb+concat+Linear1+b1) matmul -> tanh -> Linear2(+b2)
#               -> per-sample reparameterize + softmax -> one basis matmul
#               -> weighted combination -> lane-dense 2D store
# ---------------------------------------------------------------------------
def fused_kernel(idx_u_ref, idx_i_ref, eps_ref, x_ref, slab_ref, o_ref):
    B = x_ref.shape[0]
    NB, S, L, H = NUM_BASES, N_SAMPLES, NUM_LABELS, KEY_QUERY_SIZE

    # --- combined one-hot: [user one-hot | item one-hot | 1] -> [B, 23] ---
    cols = jax.lax.broadcasted_iota(jnp.int32, (B, ONE_HOT_DIM), 1)
    onehot = ((cols == idx_u_ref[...])
              | (cols == idx_i_ref[...] + NUM_USER)
              | (cols == ONE_HOT_DIM - 1)).astype(jnp.float32)

    # --- embedding gather + concat + Linear1 + b1 in ONE MXU matmul ---
    m1 = slab_ref[ROW_M1:ROW_M1 + ONE_HOT_DIM, :H]                      # [23, H]
    h = jnp.tanh(jnp.dot(onehot, m1, preferred_element_type=jnp.float32))

    # --- Linear2 with b2 folded via a ones column ---
    w2a = slab_ref[ROW_W2:ROW_W2 + H + 1, :2 * NB]                      # [H+1, 2NB]
    h1 = jnp.concatenate([h, jnp.ones((B, 1), jnp.float32)], axis=1)    # [B, H+1]
    logit = jnp.dot(h1, w2a, preferred_element_type=jnp.float32)        # [B, 2NB]
    mu = logit[:, :NB]                                                  # [B, NB]
    std = jnp.exp(0.5 * logit[:, NB:])                                  # [B, NB]

    # --- all NB basis projections in ONE matmul: [B,K] @ [K, NB*L] ---
    wbf = slab_ref[ROW_WB:ROW_WB + STATE_SIZE, :NB * L]                 # [K, NB*L]
    logits_flat = jnp.dot(x_ref[...], wbf,
                          preferred_element_type=jnp.float32)           # [B, NB*L]
    g = [logits_flat[:, n * L:(n + 1) * L] for n in range(NB)]          # NB x [B, L]

    # --- per-sample reparameterize + softmax + basis mix, all 2D [B, *] ---
    eps2d = eps_ref[...]                                                # [B, S*NB]
    blocks = []
    for s in range(S):                                                  # static unroll
        z = eps2d[:, s * NB:(s + 1) * NB] * std + mu                    # [B, NB]
        z = z - jnp.max(z, axis=1, keepdims=True)
        e = jnp.exp(z)
        coef = e / jnp.sum(e, axis=1, keepdims=True)                    # exact divide
        blk = coef[:, 0:1] * g[0]
        for n in range(1, NB):
            blk = blk + coef[:, n:n + 1] * g[n]                         # [B, L]
        blocks.append(blk)

    # Single lane-dense 2D store [B, S*L]; wrapper reshape to [B,S,L] is a bitcast.
    o_ref[...] = jnp.concatenate(blocks, axis=1)


# ---------------------------------------------------------------------------
# One-time parameter packing (NOT in the per-call path)
# ---------------------------------------------------------------------------
def prepare_fused_params(emb_tables, params):
    hp = jax.lax.Precision.HIGHEST
    A = ATTRIBUTE_DIM
    tab_u, tab_i = emb_tables["user"], emb_tables["item"]
    W1, b1 = params["W1"], params["b1"]
    W2, b2 = params["W2"], params["b2"]
    Wb = params["Wb"]

    # M1 = blockdiag(tab_u, tab_i, 1) @ [[W1];[b1]]  -> [NU+NI+1, H]
    m1 = jnp.concatenate([jnp.dot(tab_u, W1[:A, :], precision=hp),
                          jnp.dot(tab_i, W1[A:, :], precision=hp),
                          b1], axis=0)
    w2a = jnp.concatenate([W2, b2], axis=0)                              # [H+1, 2NB]
    wb_flat = jnp.transpose(Wb, (1, 0, 2)).reshape(STATE_SIZE,
                                                   NUM_BASES * NUM_LABELS)

    slab = jnp.zeros((SLAB_ROWS, SLAB_COLS), jnp.float32)
    slab = slab.at[ROW_M1:ROW_M1 + m1.shape[0], :m1.shape[1]].set(m1)
    slab = slab.at[ROW_W2:ROW_W2 + w2a.shape[0], :w2a.shape[1]].set(w2a)
    slab = slab.at[ROW_WB:ROW_WB + wb_flat.shape[0], :wb_flat.shape[1]].set(wb_flat)
    return slab


# ---------------------------------------------------------------------------
# Per-call wrapper: only the pallas_call (plus free bitcast reshape) under jit.
# ---------------------------------------------------------------------------
@jax.jit
def stochastic_basis_cust_linear(x, idx_user, idx_item, eps2d, slab):
    B = x.shape[0]
    vmem = pl.BlockSpec(memory_space=pltpu.MemorySpace.VMEM)
    out_flat = pl.pallas_call(
        fused_kernel,
        out_shape=jax.ShapeDtypeStruct((B, N_SAMPLES * NUM_LABELS), jnp.float32),
        in_specs=[vmem] * 5,
        out_specs=vmem,
    )(idx_user, idx_item, eps2d, x, slab)
    return out_flat.reshape(B, N_SAMPLES, NUM_LABELS)


# ---------------------------------------------------------------------------
if __name__ == "__main__":
    key = jax.random.PRNGKey(0)
    keys = jax.random.split(key, 10)

    # Embedding tables: uniform [-0.01, 0.01] (module's meta-parameter init)
    emb_tables = {
        name: jax.random.uniform(keys[i], (num_meta, ATTRIBUTE_DIM),
                                 jnp.float32, -0.01, 0.01)
        for i, (name, num_meta) in enumerate(META_UNITS)
    }

    Din = ATTRIBUTE_DIM * len(META_UNITS)

    def xavier(k, shape):
        limit = float(np.sqrt(6.0 / (shape[0] + shape[1])))
        return jax.random.uniform(k, shape, jnp.float32, -limit, limit)

    params = {
        "W1": xavier(keys[2], (Din, KEY_QUERY_SIZE)),
        "b1": jnp.zeros((1, KEY_QUERY_SIZE), jnp.float32),
        "W2": xavier(keys[3], (KEY_QUERY_SIZE, 2 * NUM_BASES)),
        "b2": jnp.zeros((1, 2 * NUM_BASES), jnp.float32),
        # Wb[n] = BasesList[n].weight.T  (PyTorch Linear weight is [L, K])
        "Wb": jnp.stack([xavier(k, (STATE_SIZE, NUM_LABELS))
                         for k in jax.random.split(keys[4], NUM_BASES)], axis=0),
    }

    # One-time packing of all weights into the kernel's single VMEM slab.
    slab = jax.block_until_ready(prepare_fused_params(emb_tables, params))

    x = jax.random.normal(keys[5], (BATCH, STATE_SIZE), jnp.float32)
    # Indices arrive as [B,1] int32 (a [B]->[B,1] reshape is a free bitcast for callers).
    idx_user = jax.random.randint(keys[6], (BATCH, 1), 0, META_UNITS[0][1], jnp.int32)
    idx_item = jax.random.randint(keys[7], (BATCH, 1), 0, META_UNITS[1][1], jnp.int32)
    # eps plays the role of torch.Tensor(size).normal_(); generated directly in the
    # kernel's 2D layout [B, S*NB] (column = s*NB + n) — iid noise, so layout is free.
    eps2d = jax.random.normal(keys[8], (BATCH, N_SAMPLES * NUM_BASES), jnp.float32)

    out = jax.block_until_ready(
        stochastic_basis_cust_linear(x, idx_user, idx_item, eps2d, slab))

    # ---- pure-JAX reference (full f32 precision) ----
    hp = jax.lax.Precision.HIGHEST
    emb_cat = jnp.concatenate([emb_tables["user"][idx_user[:, 0]],
                               emb_tables["item"][idx_item[:, 0]]], axis=1)
    h = jnp.tanh(jnp.dot(emb_cat, params["W1"], precision=hp) + params["b1"])
    logit = jnp.dot(h, params["W2"], precision=hp) + params["b2"]
    mu, logvar = logit[:, :NUM_BASES], logit[:, NUM_BASES:]
    std = jnp.exp(0.5 * logvar)
    eps3 = eps2d.reshape(BATCH, N_SAMPLES, NUM_BASES)
    coef_ref = jax.nn.softmax(eps3 * std[:, None, :] + mu[:, None, :], axis=-1)
    logits_on_bases = jnp.einsum("bk,nkl->bnl", x, params["Wb"], precision=hp)
    ref = jnp.einsum("bsn,bnl->bsl", coef_ref, logits_on_bases, precision=hp)

    assert out.shape == (BATCH, N_SAMPLES, NUM_LABELS)
    # Exact softmax divide (no approx reciprocal) -> tolerance tightened 5e-3 -> 2e-4;
    # remaining gap is MXU f32 pass precision and the one-time M1 reassociation.
    np.testing.assert_allclose(np.asarray(out), np.asarray(ref),
                               rtol=2e-4, atol=2e-4)
    print("KERNEL_OK")
</pallas_src>

<mosaic_0001>
module attributes {stable_mosaic.version = 11 : i64} {
  func.func @fused_kernel(%arg0: memref<16x1xi32, #tpu.memory_space<vmem>>, %arg1: memref<16x1xi32, #tpu.memory_space<vmem>>, %arg2: memref<16x16xf32, #tpu.memory_space<vmem>>, %arg3: memref<16x32xf32, #tpu.memory_space<vmem>>, %arg4: memref<80x64xf32, #tpu.memory_space<vmem>>, %arg5: memref<16x64xf32, #tpu.memory_space<vmem>>) attributes {dimension_semantics = [], scalar_prefetch = 0 : i64, scratch_operands = 0 : i64, tpu.core_type = #tpu.core_type<tc>} {
    %0 = tpu.iota {dimensions = array<i32: 1>} : vector<16x23xi32>
    %c0 = arith.constant 0 : index
    %c0_0 = arith.constant 0 : index
    %1 = vector.load %arg0[%c0, %c0_0] : memref<16x1xi32, #tpu.memory_space<vmem>>, vector<16x1xi32>
    %2 = vector.broadcast %1 : vector<16x1xi32> to vector<16x23xi32>
    %3 = arith.cmpi eq, %0, %2 : vector<16x23xi32>
    %c0_1 = arith.constant 0 : index
    %c0_2 = arith.constant 0 : index
    %4 = vector.load %arg1[%c0_1, %c0_2] : memref<16x1xi32, #tpu.memory_space<vmem>>, vector<16x1xi32>
    %c10_i32 = arith.constant 10 : i32
    %5 = vector.broadcast %c10_i32 : i32 to vector<16x1xi32>
    %6 = arith.addi %4, %5 : vector<16x1xi32>
    %7 = vector.broadcast %6 : vector<16x1xi32> to vector<16x23xi32>
    %8 = arith.cmpi eq, %0, %7 : vector<16x23xi32>
    %9 = arith.ori %3, %8 : vector<16x23xi1>
    %c22_i32 = arith.constant 22 : i32
    %10 = vector.broadcast %c22_i32 : i32 to vector<16x23xi32>
    %11 = arith.cmpi eq, %0, %10 : vector<16x23xi32>
    %12 = arith.ori %9, %11 : vector<16x23xi1>
    %13 = arith.extui %12 : vector<16x23xi1> to vector<16x23xi32>
    %14 = arith.sitofp %13 : vector<16x23xi32> to vector<16x23xf32>
    %c0_3 = arith.constant 0 : index
    %c0_4 = arith.constant 0 : index
    %15 = vector.load %arg4[%c0_3, %c0_4] : memref<80x64xf32, #tpu.memory_space<vmem>>, vector<23x16xf32>
    %cst = arith.constant dense<0.000000e+00> : vector<16x16xf32>
    %16 = tpu.matmul %14, %15, %cst {dimension_numbers = #tpu.dot_dimension_numbers<[1], [0], [0], [1], [0, 0, 1, 1], [], []>} : vector<16x23xf32>, vector<23x16xf32>, vector<16x16xf32> -> vector<16x16xf32>
    %17 = math.tanh %16 : vector<16x16xf32>
    %c24 = arith.constant 24 : index
    %c0_5 = arith.constant 0 : index
    %18 = vector.load %arg4[%c24, %c0_5] : memref<80x64xf32, #tpu.memory_space<vmem>>, vector<17x8xf32>
    %cst_6 = arith.constant 1.000000e+00 : f32
    %19 = vector.broadcast %cst_6 : f32 to vector<16x1xf32>
    %20 = tpu.concatenate %17, %19 in 1 : vector<16x16xf32>, vector<16x1xf32> -> vector<16x17xf32>
    %cst_7 = arith.constant dense<0.000000e+00> : vector<16x8xf32>
    %21 = tpu.matmul %20, %18, %cst_7 {dimension_numbers = #tpu.dot_dimension_numbers<[1], [0], [0], [1], [0, 0, 1, 1], [], []>} : vector<16x17xf32>, vector<17x8xf32>, vector<16x8xf32> -> vector<16x8xf32>
    %22 = vector.extract_strided_slice %21 {offsets = [0, 0], sizes = [16, 4], strides = [1, 1]} : vector<16x8xf32> to vector<16x4xf32>
    %23 = vector.extract_strided_slice %21 {offsets = [0, 4], sizes = [16, 4], strides = [1, 1]} : vector<16x8xf32> to vector<16x4xf32>
    %cst_8 = arith.constant 5.000000e-01 : f32
    %24 = vector.broadcast %cst_8 : f32 to vector<16x4xf32>
    %25 = arith.mulf %24, %23 : vector<16x4xf32>
    %26 = math.exp %25 : vector<16x4xf32>
    %c48 = arith.constant 48 : index
    %c0_9 = arith.constant 0 : index
    %27 = vector.load %arg4[%c48, %c0_9] : memref<80x64xf32, #tpu.memory_space<vmem>>, vector<32x64xf32>
    %c0_10 = arith.constant 0 : index
    %c0_11 = arith.constant 0 : index
    %28 = vector.load %arg3[%c0_10, %c0_11] : memref<16x32xf32, #tpu.memory_space<vmem>>, vector<16x32xf32>
    %cst_12 = arith.constant dense<0.000000e+00> : vector<16x64xf32>
    %29 = tpu.matmul %28, %27, %cst_12 {dimension_numbers = #tpu.dot_dimension_numbers<[1], [0], [0], [1], [0, 0, 1, 1], [], []>} : vector<16x32xf32>, vector<32x64xf32>, vector<16x64xf32> -> vector<16x64xf32>
    %30 = vector.extract_strided_slice %29 {offsets = [0, 0], sizes = [16, 16], strides = [1, 1]} : vector<16x64xf32> to vector<16x16xf32>
    %31 = vector.extract_strided_slice %29 {offsets = [0, 16], sizes = [16, 16], strides = [1, 1]} : vector<16x64xf32> to vector<16x16xf32>
    %32 = vector.extract_strided_slice %29 {offsets = [0, 32], sizes = [16, 16], strides = [1, 1]} : vector<16x64xf32> to vector<16x16xf32>
    %33 = vector.extract_strided_slice %29 {offsets = [0, 48], sizes = [16, 16], strides = [1, 1]} : vector<16x64xf32> to vector<16x16xf32>
    %c0_13 = arith.constant 0 : index
    %c0_14 = arith.constant 0 : index
    %34 = vector.load %arg2[%c0_13, %c0_14] : memref<16x16xf32, #tpu.memory_space<vmem>>, vector<16x16xf32>
    %35 = vector.extract_strided_slice %34 {offsets = [0, 0], sizes = [16, 4], strides = [1, 1]} : vector<16x16xf32> to vector<16x4xf32>
    %36 = arith.mulf %35, %26 : vector<16x4xf32>
    %37 = arith.addf %36, %22 : vector<16x4xf32>
    %cst_15 = arith.constant dense<0xFF800000> : vector<16xf32>
    %38 = vector.multi_reduction <maximumf>, %37, %cst_15 [1] : vector<16x4xf32> to vector<16xf32>
    %39 = vector.shape_cast %38 : vector<16xf32> to vector<16x1xf32>
    %40 = vector.broadcast %39 : vector<16x1xf32> to vector<16x4xf32>
    %41 = arith.subf %37, %40 : vector<16x4xf32>
    %42 = math.exp %41 : vector<16x4xf32>
    %cst_16 = arith.constant dense<0.000000e+00> : vector<16xf32>
    %43 = vector.multi_reduction <add>, %42, %cst_16 [1] : vector<16x4xf32> to vector<16xf32>
    %44 = vector.shape_cast %43 : vector<16xf32> to vector<16x1xf32>
    %45 = vector.broadcast %44 : vector<16x1xf32> to vector<16x4xf32>
    %46 = arith.divf %42, %45 : vector<16x4xf32>
    %47 = vector.extract_strided_slice %46 {offsets = [0, 0], sizes = [16, 1], strides = [1, 1]} : vector<16x4xf32> to vector<16x1xf32>
    %48 = vector.broadcast %47 : vector<16x1xf32> to vector<16x16xf32>
    %49 = arith.mulf %48, %30 : vector<16x16xf32>
    %50 = vector.extract_strided_slice %46 {offsets = [0, 1], sizes = [16, 1], strides = [1, 1]} : vector<16x4xf32> to vector<16x1xf32>
    %51 = vector.broadcast %50 : vector<16x1xf32> to vector<16x16xf32>
    %52 = arith.mulf %51, %31 : vector<16x16xf32>
    %53 = arith.addf %49, %52 : vector<16x16xf32>
    %54 = vector.extract_strided_slice %46 {offsets = [0, 2], sizes = [16, 1], strides = [1, 1]} : vector<16x4xf32> to vector<16x1xf32>
    %55 = vector.broadcast %54 : vector<16x1xf32> to vector<16x16xf32>
    %56 = arith.mulf %55, %32 : vector<16x16xf32>
    %57 = arith.addf %53, %56 : vector<16x16xf32>
    %58 = vector.extract_strided_slice %46 {offsets = [0, 3], sizes = [16, 1], strides = [1, 1]} : vector<16x4xf32> to vector<16x1xf32>
    %59 = vector.broadcast %58 : vector<16x1xf32> to vector<16x16xf32>
    %60 = arith.mulf %59, %33 : vector<16x16xf32>
    %61 = arith.addf %57, %60 : vector<16x16xf32>
    %62 = vector.extract_strided_slice %34 {offsets = [0, 4], sizes = [16, 4], strides = [1, 1]} : vector<16x16xf32> to vector<16x4xf32>
    %63 = arith.mulf %62, %26 : vector<16x4xf32>
    %64 = arith.addf %63, %22 : vector<16x4xf32>
    %cst_17 = arith.constant dense<0xFF800000> : vector<16xf32>
    %65 = vector.multi_reduction <maximumf>, %64, %cst_17 [1] : vector<16x4xf32> to vector<16xf32>
    %66 = vector.shape_cast %65 : vector<16xf32> to vector<16x1xf32>
    %67 = vector.broadcast %66 : vector<16x1xf32> to vector<16x4xf32>
    %68 = arith.subf %64, %67 : vector<16x4xf32>
    %69 = math.exp %68 : vector<16x4xf32>
    %cst_18 = arith.constant dense<0.000000e+00> : vector<16xf32>
    %70 = vector.multi_reduction <add>, %69, %cst_18 [1] : vector<16x4xf32> to vector<16xf32>
    %71 = vector.shape_cast %70 : vector<16xf32> to vector<16x1xf32>
    %72 = vector.broadcast %71 : vector<16x1xf32> to vector<16x4xf32>
    %73 = arith.divf %69, %72 : vector<16x4xf32>
    %74 = vector.extract_strided_slice %73 {offsets = [0, 0], sizes = [16, 1], strides = [1, 1]} : vector<16x4xf32> to vector<16x1xf32>
    %75 = vector.broadcast %74 : vector<16x1xf32> to vector<16x16xf32>
    %76 = arith.mulf %75, %30 : vector<16x16xf32>
    %77 = vector.extract_strided_slice %73 {offsets = [0, 1], sizes = [16, 1], strides = [1, 1]} : vector<16x4xf32> to vector<16x1xf32>
    %78 = vector.broadcast %77 : vector<16x1xf32> to vector<16x16xf32>
    %79 = arith.mulf %78, %31 : vector<16x16xf32>
    %80 = arith.addf %76, %79 : vector<16x16xf32>
    %81 = vector.extract_strided_slice %73 {offsets = [0, 2], sizes = [16, 1], strides = [1, 1]} : vector<16x4xf32> to vector<16x1xf32>
    %82 = vector.broadcast %81 : vector<16x1xf32> to vector<16x16xf32>
    %83 = arith.mulf %82, %32 : vector<16x16xf32>
    %84 = arith.addf %80, %83 : vector<16x16xf32>
    %85 = vector.extract_strided_slice %73 {offsets = [0, 3], sizes = [16, 1], strides = [1, 1]} : vector<16x4xf32> to vector<16x1xf32>
    %86 = vector.broadcast %85 : vector<16x1xf32> to vector<16x16xf32>
    %87 = arith.mulf %86, %33 : vector<16x16xf32>
    %88 = arith.addf %84, %87 : vector<16x16xf32>
    %89 = vector.extract_strided_slice %34 {offsets = [0, 8], sizes = [16, 4], strides = [1, 1]} : vector<16x16xf32> to vector<16x4xf32>
    %90 = arith.mulf %89, %26 : vector<16x4xf32>
    %91 = arith.addf %90, %22 : vector<16x4xf32>
    %cst_19 = arith.constant dense<0xFF800000> : vector<16xf32>
    %92 = vector.multi_reduction <maximumf>, %91, %cst_19 [1] : vector<16x4xf32> to vector<16xf32>
    %93 = vector.shape_cast %92 : vector<16xf32> to vector<16x1xf32>
    %94 = vector.broadcast %93 : vector<16x1xf32> to vector<16x4xf32>
    %95 = arith.subf %91, %94 : vector<16x4xf32>
    %96 = math.exp %95 : vector<16x4xf32>
    %cst_20 = arith.constant dense<0.000000e+00> : vector<16xf32>
    %97 = vector.multi_reduction <add>, %96, %cst_20 [1] : vector<16x4xf32> to vector<16xf32>
    %98 = vector.shape_cast %97 : vector<16xf32> to vector<16x1xf32>
    %99 = vector.broadcast %98 : vector<16x1xf32> to vector<16x4xf32>
    %100 = arith.divf %96, %99 : vector<16x4xf32>
    %101 = vector.extract_strided_slice %100 {offsets = [0, 0], sizes = [16, 1], strides = [1, 1]} : vector<16x4xf32> to vector<16x1xf32>
    %102 = vector.broadcast %101 : vector<16x1xf32> to vector<16x16xf32>
    %103 = arith.mulf %102, %30 : vector<16x16xf32>
    %104 = vector.extract_strided_slice %100 {offsets = [0, 1], sizes = [16, 1], strides = [1, 1]} : vector<16x4xf32> to vector<16x1xf32>
    %105 = vector.broadcast %104 : vector<16x1xf32> to vector<16x16xf32>
    %106 = arith.mulf %105, %31 : vector<16x16xf32>
    %107 = arith.addf %103, %106 : vector<16x16xf32>
    %108 = vector.extract_strided_slice %100 {offsets = [0, 2], sizes = [16, 1], strides = [1, 1]} : vector<16x4xf32> to vector<16x1xf32>
    %109 = vector.broadcast %108 : vector<16x1xf32> to vector<16x16xf32>
    %110 = arith.mulf %109, %32 : vector<16x16xf32>
    %111 = arith.addf %107, %110 : vector<16x16xf32>
    %112 = vector.extract_strided_slice %100 {offsets = [0, 3], sizes = [16, 1], strides = [1, 1]} : vector<16x4xf32> to vector<16x1xf32>
    %113 = vector.broadcast %112 : vector<16x1xf32> to vector<16x16xf32>
    %114 = arith.mulf %113, %33 : vector<16x16xf32>
    %115 = arith.addf %111, %114 : vector<16x16xf32>
    %116 = vector.extract_strided_slice %34 {offsets = [0, 12], sizes = [16, 4], strides = [1, 1]} : vector<16x16xf32> to vector<16x4xf32>
    %117 = arith.mulf %116, %26 : vector<16x4xf32>
    %118 = arith.addf %117, %22 : vector<16x4xf32>
    %cst_21 = arith.constant dense<0xFF800000> : vector<16xf32>
    %119 = vector.multi_reduction <maximumf>, %118, %cst_21 [1] : vector<16x4xf32> to vector<16xf32>
    %120 = vector.shape_cast %119 : vector<16xf32> to vector<16x1xf32>
    %121 = vector.broadcast %120 : vector<16x1xf32> to vector<16x4xf32>
    %122 = arith.subf %118, %121 : vector<16x4xf32>
    %123 = math.exp %122 : vector<16x4xf32>
    %cst_22 = arith.constant dense<0.000000e+00> : vector<16xf32>
    %124 = vector.multi_reduction <add>, %123, %cst_22 [1] : vector<16x4xf32> to vector<16xf32>
    %125 = vector.shape_cast %124 : vector<16xf32> to vector<16x1xf32>
    %126 = vector.broadcast %125 : vector<16x1xf32> to vector<16x4xf32>
    %127 = arith.divf %123, %126 : vector<16x4xf32>
    %128 = vector.extract_strided_slice %127 {offsets = [0, 0], sizes = [16, 1], strides = [1, 1]} : vector<16x4xf32> to vector<16x1xf32>
    %129 = vector.broadcast %128 : vector<16x1xf32> to vector<16x16xf32>
    %130 = arith.mulf %129, %30 : vector<16x16xf32>
    %131 = vector.extract_strided_slice %127 {offsets = [0, 1], sizes = [16, 1], strides = [1, 1]} : vector<16x4xf32> to vector<16x1xf32>
    %132 = vector.broadcast %131 : vector<16x1xf32> to vector<16x16xf32>
    %133 = arith.mulf %132, %31 : vector<16x16xf32>
    %134 = arith.addf %130, %133 : vector<16x16xf32>
    %135 = vector.extract_strided_slice %127 {offsets = [0, 2], sizes = [16, 1], strides = [1, 1]} : vector<16x4xf32> to vector<16x1xf32>
    %136 = vector.broadcast %135 : vector<16x1xf32> to vector<16x16xf32>
    %137 = arith.mulf %136, %32 : vector<16x16xf32>
    %138 = arith.addf %134, %137 : vector<16x16xf32>
    %139 = vector.extract_strided_slice %127 {offsets = [0, 3], sizes = [16, 1], strides = [1, 1]} : vector<16x4xf32> to vector<16x1xf32>
    %140 = vector.broadcast %139 : vector<16x1xf32> to vector<16x16xf32>
    %141 = arith.mulf %140, %33 : vector<16x16xf32>
    %142 = arith.addf %138, %141 : vector<16x16xf32>
    %143 = tpu.concatenate %61, %88, %115, %142 in 1 : vector<16x16xf32>, vector<16x16xf32>, vector<16x16xf32>, vector<16x16xf32> -> vector<16x64xf32>
    %c0_23 = arith.constant 0 : index
    %c0_24 = arith.constant 0 : index
    %144 = vector.load %arg5[%c0_23, %c0_24] : memref<16x64xf32, #tpu.memory_space<vmem>>, vector<16x64xf32>
    tpu.vector_store %arg5[%c0_23, %c0_24], %143 {strides = array<i32>} : memref<16x64xf32, #tpu.memory_space<vmem>>, vector<16x64xf32>,
    return
  }
}

</mosaic_0001>

<llo_original>
// kernel: stochastic_basis_cust_linear.1
$region0: #{stochastic_basis_cust_linear.1}
  #allocation0 [shape = 'u32[]', space=smem, size = 0x4, offset = 0x4, fixed_abs, tag = 'smem constant byte address 0x4 - core index']
  #allocation1 [shape = 'u32[144,128]{1,0:T(1,128)}', space=vmem, size = 0x12000, scoped, tag = 'internal scratch']
  %s0 = inlined_call_operand.vmem [shape: s32[16,1], index: 0, kind: input, shape index: {}]
  %s1 = inlined_call_operand.vmem [shape: s32[16,1], index: 1, kind: input, shape index: {}]
  %s2 = inlined_call_operand.vmem [shape: f32[16,16], index: 2, kind: input, shape index: {}]
  %s3 = inlined_call_operand.vmem [shape: f32[16,32], index: 3, kind: input, shape index: {}]
  %s4 = inlined_call_operand.vmem [shape: f32[80,64], index: 4, kind: input, shape index: {}]
  %s5 = inlined_call_operand.vmem [shape: f32[16,64], index: 5, kind: output, shape index: {}]
  %s6 = sld [smem:[#allocation0]]
  $region30: #{stochastic_basis_cust_linear.1} parent=0
    _
  %s8 = ssub.s32 1, %s6
  %s9 = scalar_select 0, %s8, %s6
  // Predicated region
  $region2: #{stochastic_basis_cust_linear.1} parent=0 // pred_check
    _
  $region3: #{stochastic_basis_cust_linear.1} parent=0 // pred_check_branch
    %11 = sbr.rel (0) target = $region5
  $region4: #{stochastic_basis_cust_linear.1} parent=0 // pred_region
    _
  $region5: #{stochastic_basis_cust_linear.1} parent=0 // pred_fallthru
    _
  // Predicated region
  $region6: #{stochastic_basis_cust_linear.1} parent=0 // pred_check
    _
  $region7: #{stochastic_basis_cust_linear.1} parent=0 // pred_check_branch
    %13 = sbr.rel (0) target = $region9
  $region8: #{stochastic_basis_cust_linear.1} parent=0 // pred_region
    _
  $region9: #{stochastic_basis_cust_linear.1} parent=0 // pred_fallthru
    _
  // Predicated region
  $region10: #{stochastic_basis_cust_linear.1} parent=0 // pred_check
    _
  $region11: #{stochastic_basis_cust_linear.1} parent=0 // pred_check_branch
    %15 = sbr.rel (0) target = $region13
  $region12: #{stochastic_basis_cust_linear.1} parent=0 // pred_region
    _
  $region13: #{stochastic_basis_cust_linear.1} parent=0 // pred_fallthru
    _
  // Predicated region
  $region14: #{stochastic_basis_cust_linear.1} parent=0 // pred_check
    _
  $region15: #{stochastic_basis_cust_linear.1} parent=0 // pred_check_branch
    %17 = sbr.rel (0) target = $region17
  $region16: #{stochastic_basis_cust_linear.1} parent=0 // pred_region
    _
  $region17: #{stochastic_basis_cust_linear.1} parent=0 // pred_fallthru
    _
  // Predicated region
  $region18: #{stochastic_basis_cust_linear.1} parent=0 // pred_check
    _
  $region19: #{stochastic_basis_cust_linear.1} parent=0 // pred_check_branch
    %19 = sbr.rel (0) target = $region21
  $region20: #{stochastic_basis_cust_linear.1} parent=0 // pred_region
    _
  $region21: #{stochastic_basis_cust_linear.1} parent=0 // pred_fallthru
    _
  %v20 = vlaneseq
  %v21 = vand.u32 %v20, 127
  %v22 = vld [vmem:[%s0] sm:$0xff]
  %v23 = vld [vmem:[%s0 + $0x8] sm:$0xff]
  %24 = vset.pattern.permute.xlu0 0
  %25 = vperm.xlu0 %24, %v22
  %v26 = vpop.permute.xlu0 %25
  %27 = vset.pattern.permute.xlu0 0
  %28 = vperm.xlu0 %27, %v23
  %v29 = vpop.permute.xlu0 %28
  %vm30 = vcmp.eq.s32.totalorder %v21, %v26
  %vm31 = vcmp.eq.s32.totalorder %v21, %v29
  %v32 = vld [vmem:[%s1] sm:$0xff]
  %v33 = vld [vmem:[%s1 + $0x8] sm:$0xff]
  %v34 = vadd.s32 %v32, 10
  %v35 = vadd.s32 %v33, 10
  %36 = vset.pattern.permute.xlu0 0
  %37 = vperm.xlu0 %36, %v34
  %v38 = vpop.permute.xlu0 %37
  %39 = vset.pattern.permute.xlu0 0
  %40 = vperm.xlu0 %39, %v35
  %v41 = vpop.permute.xlu0 %40
  %vm42 = vcmp.eq.s32.totalorder %v21, %v38
  %vm43 = vcmp.eq.s32.totalorder %v21, %v41
  %vm44 = vmor %vm30, %vm42
  %vm45 = vmor %vm31, %vm43
  %vm46 = vcmp.eq.s32.totalorder %v21, 22
  %vm47 = vmor %vm44, %vm46
  %vm48 = vmor %vm45, %vm46
  %v49 = vsel %vm47, 1, 0
  %v50 = vsel %vm48, 1, 0
  %v51 = vcvt.s32.f32 %v49
  %v52 = vcvt.s32.f32 %v50
  %v53 = vld [vmem:[%s4] sm:$0xff]
  %v54 = vld [vmem:[%s4 + $0x8] sm:$0xff]
  %v55 = vld [vmem:[%s4 + $0x10] sm:$0x7f]
  %vm56 = vcmask 187392
  %v58 = vsel %vm56, %v51, 0
  %v61 = vsel %vm56, %v52, 0
  %vm63 = vcmask 1046528
  %v65 = vsel %vm63, %v55, 0
  %67 = vmatprep.subr.mxu0 0.0
  %68 = vmatpush1.msra.mxu0 0.0
  %69 = vmatprep.subr.mxu0 0.0
  %70 = vmatpush1.msra.mxu0 0.0
  %71 = vmatprep.subr.mxu0 0.0
  %72 = vmatpush1.msra.mxu0 0.0
  %73 = vmatprep.subr.mxu0 0.0
  %74 = vmatpush1.msra.mxu0 0.0
  %75 = vmatprep.subr.mxu0 0.0
  %76 = vmatpush1.msra.mxu0 0.0
  %77 = vmatprep.subr.mxu0 0.0
  %78 = vmatpush1.msra.mxu0 0.0
  %79 = vmatprep.subr.mxu0 0.0
  %80 = vmatpush1.msra.mxu0 0.0
  %81 = vmatprep.subr.mxu0 0.0
  %82 = vmatpush1.msra.mxu0 0.0
  %83 = vmatprep.subr.mxu0 0.0
  %84 = vmatpush1.msra.mxu0 0.0
  %85 = vmatprep.subr.mxu0 0.0
  %86 = vmatpush1.msra.mxu0 0.0
  %87 = vmatprep.subr.mxu0 0.0
  %88 = vmatpush1.msra.mxu0 0.0
  %89 = vmatprep.subr.mxu0 0.0
  %90 = vmatpush1.msra.mxu0 0.0
  %91 = vmatprep.subr.mxu0 0.0
  %92 = vmatpush1.msra.mxu0 0.0
  %93 = vmatprep.subr.mxu0 0.0
  %94 = vmatpush1.msra.mxu0 %v65
  %95 = vmatprep.subr.mxu0 0.0
  %96 = vmatpush1.msra.mxu0 %v54
  %97 = vmatprep.subr.mxu0 0.0
  %98 = vmatpush1.msra.mxu0 %v53
  %99 = vmatprep.subr.mxu0 0.0
  %100 = vmatpush2.msra.mxu0 0.0
  %101 = vmatprep.subr.mxu0 0.0
  %102 = vmatpush2.msra.mxu0 0.0
  %103 = vmatprep.subr.mxu0 0.0
  %104 = vmatpush2.msra.mxu0 0.0
  %105 = vmatprep.subr.mxu0 0.0
  %106 = vmatpush2.msra.mxu0 0.0
  %107 = vmatprep.subr.mxu0 0.0
  %108 = vmatpush2.msra.mxu0 0.0
  %109 = vmatprep.subr.mxu0 0.0
  %110 = vmatpush2.msra.mxu0 0.0
  %111 = vmatprep.subr.mxu0 0.0
  %112 = vmatpush2.msra.mxu0 0.0
  %113 = vmatprep.subr.mxu0 0.0
  %114 = vmatpush2.msra.mxu0 0.0
  %115 = vmatprep.subr.mxu0 0.0
  %116 = vmatpush2.msra.mxu0 0.0
  %117 = vmatprep.subr.mxu0 0.0
  %118 = vmatpush2.msra.mxu0 0.0
  %119 = vmatprep.subr.mxu0 0.0
  %120 = vmatpush2.msra.mxu0 0.0
  %121 = vmatprep.subr.mxu0 0.0
  %122 = vmatpush2.msra.mxu0 0.0
  %123 = vmatprep.subr.mxu0 0.0
  %124 = vmatpush2.msra.mxu0 0.0
  %125 = vmatprep.subr.mxu0 0.0
  %126 = vmatpush2.msra.mxu0 0.0
  %127 = vmatprep.subr.mxu0 0.0
  %128 = vmatpush2.msra.mxu0 0.0
  %129 = vmatprep.subr.mxu0 0.0
  %130 = vmatpush2.msra.mxu0 0.0
  %131 = vmatprep.mubr.f32.mxu0 0.0
  %132 = vmatmul.mubr.f32.gmra.mxu0 %v58
  %v133 = vpop.f32.mrf.mxu0
  %v134 = vadd.f32 0.0, %v133
  %v135 = vpop.f32.mrf.mxu0
  %136 = vmatprep.mubr.f32.mxu0 0.0
  %137 = vmatmul.mubr.f32.gmra.mxu0 %v61
  %v138 = vpop.f32.mrf.mxu0
  %v139 = vadd.f32 0.0, %v138
  %v140 = vpop.f32.mrf.mxu0
  %141 = vdwg.mxu0
  %v142 = vtanh.pop %v134
  %v143 = vtanh.pop %v139
  %v144 = vld [vmem:[%s4 + $0x18] sm:$0xff]
  %v145 = vld [vmem:[%s4 + $0x20] sm:$0xff]
  %v146 = vld [vmem:[%s4 + $0x28] sm:$0x1]
  %vm147 = vcmask 130048
  %v148 = vsel %vm147, %v142, 1.0
  %v149 = vsel %vm147, %v143, 1.0
  %vm150 = vcmask 138240
  %v152 = vsel %vm150, %v148, 0
  %v155 = vsel %vm150, %v149, 0
  %vm157 = vcmask 1040384
  %v159 = vsel %vm157, %v146, 0
  %161 = vmatprep.subr.mxu0 0.0
  %162 = vmatpush1.msra.mxu0 0.0
  %163 = vmatprep.subr.mxu0 0.0
  %164 = vmatpush1.msra.mxu0 0.0
  %165 = vmatprep.subr.mxu0 0.0
  %166 = vmatpush1.msra.mxu0 0.0
  %167 = vmatprep.subr.mxu0 0.0
  %168 = vmatpush1.msra.mxu0 0.0
  %169 = vmatprep.subr.mxu0 0.0
  %170 = vmatpush1.msra.mxu0 0.0
  %171 = vmatprep.subr.mxu0 0.0
  %172 = vmatpush1.msra.mxu0 0.0
  %173 = vmatprep.subr.mxu0 0.0
  %174 = vmatpush1.msra.mxu0 0.0
  %175 = vmatprep.subr.mxu0 0.0
  %176 = vmatpush1.msra.mxu0 0.0
  %177 = vmatprep.subr.mxu0 0.0
  %178 = vmatpush1.msra.mxu0 0.0
  %179 = vmatprep.subr.mxu0 0.0
  %180 = vmatpush1.msra.mxu0 0.0
  %181 = vmatprep.subr.mxu0 0.0
  %182 = vmatpush1.msra.mxu0 0.0
  %183 = vmatprep.subr.mxu0 0.0
  %184 = vmatpush1.msra.mxu0 0.0
  %185 = vmatprep.subr.mxu0 0.0
  %186 = vmatpush1.msra.mxu0 0.0
  %187 = vmatprep.subr.mxu0 0.0
  %188 = vmatpush1.msra.mxu0 %v159
  %189 = vmatprep.subr.mxu0 0.0
  %190 = vmatpush1.msra.mxu0 %v145
  %191 = vmatprep.subr.mxu0 0.0
  %192 = vmatpush1.msra.mxu0 %v144
  %193 = vmatprep.subr.mxu0 0.0
  %194 = vmatpush2.msra.mxu0 0.0
  %195 = vmatprep.subr.mxu0 0.0
  %196 = vmatpush2.msra.mxu0 0.0
  %197 = vmatprep.subr.mxu0 0.0
  %198 = vmatpush2.msra.mxu0 0.0
  %199 = vmatprep.subr.mxu0 0.0
  %200 = vmatpush2.msra.mxu0 0.0
  %201 = vmatprep.subr.mxu0 0.0
  %202 = vmatpush2.msra.mxu0 0.0
  %203 = vmatprep.subr.mxu0 0.0
  %204 = vmatpush2.msra.mxu0 0.0
  %205 = vmatprep.subr.mxu0 0.0
  %206 = vmatpush2.msra.mxu0 0.0
  %207 = vmatprep.subr.mxu0 0.0
  %208 = vmatpush2.msra.mxu0 0.0
  %209 = vmatprep.subr.mxu0 0.0
  %210 = vmatpush2.msra.mxu0 0.0
  %211 = vmatprep.subr.mxu0 0.0
  %212 = vmatpush2.msra.mxu0 0.0
  %213 = vmatprep.subr.mxu0 0.0
  %214 = vmatpush2.msra.mxu0 0.0
  %215 = vmatprep.subr.mxu0 0.0
  %216 = vmatpush2.msra.mxu0 0.0
  %217 = vmatprep.subr.mxu0 0.0
  %218 = vmatpush2.msra.mxu0 0.0
  %219 = vmatprep.subr.mxu0 0.0
  %220 = vmatpush2.msra.mxu0 0.0
  %221 = vmatprep.subr.mxu0 0.0
  %222 = vmatpush2.msra.mxu0 0.0
  %223 = vmatprep.subr.mxu0 0.0
  %224 = vmatpush2.msra.mxu0 0.0
  %225 = vmatprep.mubr.f32.mxu0 0.0
  %226 = vmatmul.mubr.f32.gmra.mxu0 %v152
  %v227 = vpop.f32.mrf.mxu0
  %v228 = vadd.f32 0.0, %v227
  %v229 = vpop.f32.mrf.mxu0
  %230 = vmatprep.mubr.f32.mxu0 0.0
  %231 = vmatmul.mubr.f32.gmra.mxu0 %v155
  %v232 = vpop.f32.mrf.mxu0
  %v233 = vadd.f32 0.0, %v232
  %v234 = vpop.f32.mrf.mxu0
  %235 = vdwg.mxu0
  %v236 = vmul.f32 %v228, 0.5
  %v237 = vmul.f32 %v233, 0.5
  %v238 = vmul.f32 %v236, 1.442695
  %v239 = vpow.pop %v238
  %v240 = vmul.f32 %v237, 1.442695
  %v241 = vpow.pop %v240
  %v242 = vld [vmem:[%s4 + $0x30] sm:$0xff]
  %v243 = vld [vmem:[%s4 + $0x38] sm:$0xff]
  %v244 = vld [vmem:[%s4 + $0x40] sm:$0xff]
  %v245 = vld [vmem:[%s4 + $0x48] sm:$0xff]
  %v246 = vld [vmem:[%s3] sm:$0xff]
  %v247 = vld [vmem:[%s3 + $0x8] sm:$0xff]
  %vm248 = vcmask 261120
  %v250 = vsel %vm248, %v246, 0
  %v253 = vsel %vm248, %v247, 0
  %255 = vmatprep.subr.mxu0 0.0
  %256 = vmatpush1.msra.mxu0 0.0
  %257 = vmatprep.subr.mxu0 0.0
  %258 = vmatpush1.msra.mxu0 0.0
  %259 = vmatprep.subr.mxu0 0.0
  %260 = vmatpush1.msra.mxu0 0.0
  %261 = vmatprep.subr.mxu0 0.0
  %262 = vmatpush1.msra.mxu0 0.0
  %263 = vmatprep.subr.mxu0 0.0
  %264 = vmatpush1.msra.mxu0 0.0
  %265 = vmatprep.subr.mxu0 0.0
  %266 = vmatpush1.msra.mxu0 0.0
  %267 = vmatprep.subr.mxu0 0.0
  %268 = vmatpush1.msra.mxu0 0.0
  %269 = vmatprep.subr.mxu0 0.0
  %270 = vmatpush1.msra.mxu0 0.0
  %271 = vmatprep.subr.mxu0 0.0
  %272 = vmatpush1.msra.mxu0 0.0
  %273 = vmatprep.subr.mxu0 0.0
  %274 = vmatpush1.msra.mxu0 0.0
  %275 = vmatprep.subr.mxu0 0.0
  %276 = vmatpush1.msra.mxu0 0.0
  %277 = vmatprep.subr.mxu0 0.0
  %278 = vmatpush1.msra.mxu0 0.0
  %279 = vmatprep.subr.mxu0 0.0
  %280 = vmatpush1.msra.mxu0 %v245
  %281 = vmatprep.subr.mxu0 0.0
  %282 = vmatpush1.msra.mxu0 %v244
  %283 = vmatprep.subr.mxu0 0.0
  %284 = vmatpush1.msra.mxu0 %v243
  %285 = vmatprep.subr.mxu0 0.0
  %286 = vmatpush1.msra.mxu0 %v242
  %287 = vmatprep.subr.mxu0 0.0
  %288 = vmatpush2.msra.mxu0 0.0
  %289 = vmatprep.subr.mxu0 0.0
  %290 = vmatpush2.msra.mxu0 0.0
  %291 = vmatprep.subr.mxu0 0.0
  %292 = vmatpush2.msra.mxu0 0.0
  %293 = vmatprep.subr.mxu0 0.0
  %294 = vmatpush2.msra.mxu0 0.0
  %295 = vmatprep.subr.mxu0 0.0
  %296 = vmatpush2.msra.mxu0 0.0
  %297 = vmatprep.subr.mxu0 0.0
  %298 = vmatpush2.msra.mxu0 0.0
  %299 = vmatprep.subr.mxu0 0.0
  %300 = vmatpush2.msra.mxu0 0.0
  %301 = vmatprep.subr.mxu0 0.0
  %302 = vmatpush2.msra.mxu0 0.0
  %303 = vmatprep.subr.mxu0 0.0
  %304 = vmatpush2.msra.mxu0 0.0
  %305 = vmatprep.subr.mxu0 0.0
  %306 = vmatpush2.msra.mxu0 0.0
  %307 = vmatprep.subr.mxu0 0.0
  %308 = vmatpush2.msra.mxu0 0.0
  %309 = vmatprep.subr.mxu0 0.0
  %310 = vmatpush2.msra.mxu0 0.0
  %311 = vmatprep.subr.mxu0 0.0
  %312 = vmatpush2.msra.mxu0 0.0
  %313 = vmatprep.subr.mxu0 0.0
  %314 = vmatpush2.msra.mxu0 0.0
  %315 = vmatprep.subr.mxu0 0.0
  %316 = vmatpush2.msra.mxu0 0.0
  %317 = vmatprep.subr.mxu0 0.0
  %318 = vmatpush2.msra.mxu0 0.0
  %319 = vmatprep.mubr.f32.mxu0 0.0
  %320 = vmatmul.mubr.f32.gmra.mxu0 %v250
  %v321 = vpop.f32.mrf.mxu0
  %v322 = vadd.f32 0.0, %v321
  %v323 = vpop.f32.mrf.mxu0
  %324 = vmatprep.mubr.f32.mxu0 0.0
  %325 = vmatmul.mubr.f32.gmra.mxu0 %v253
  %v326 = vpop.f32.mrf.mxu0
  %v327 = vadd.f32 0.0, %v326
  %v328 = vpop.f32.mrf.mxu0
  %329 = vdwg.mxu0
  %v330 = vld [vmem:[%s2] sm:$0xff]
  %v331 = vld [vmem:[%s2 + $0x8] sm:$0xff]
  %334 = vrot.lane.b32.xlu0 %v239, 124
  %v335 = vpop.permute.xlu0 %334
  %336 = vrot.lane.b32.xlu0 %v241, 124
  %v337 = vpop.permute.xlu0 %336
  %v340 = vmul.f32 %v330, %v335
  %v341 = vmul.f32 %v331, %v337
  %v342 = vadd.f32 %v340, %v228
  %v343 = vadd.f32 %v341, %v233
  %vm344 = vcmask 31744
  %v345 = vsel %vm344, %v342, -inf
  %346 = vmax.xlane.f32.xlu0 %v345
  %v347 = vpop.xlane.xlu0 %346
  %v348 = vsel %vm344, %v343, -inf
  %349 = vmax.xlane.f32.xlu0 %v348
  %v350 = vpop.xlane.xlu0 %349
  %v351 = vsub.f32 %v342, %v347
  %v352 = vsub.f32 %v343, %v350
  %v353 = vmul.f32 %v351, 1.442695
  %v354 = vpow.pop %v353
  %v355 = vmul.f32 %v352, 1.442695
  %v356 = vpow.pop %v355
  %v357 = vsel %vm344, %v354, 0.0
  %358 = vadd.xlane.f32.xlu0 %v357
  %v359 = vpop.xlane.xlu0 %358
  %v360 = vsel %vm344, %v356, 0.0
  %361 = vadd.xlane.f32.xlu0 %v360
  %v362 = vpop.xlane.xlu0 %361
  %v363 = vrcp.pop %v359
  %v364 = vmul.f32 %v354, %v363
  %v365 = vrcp.pop %v362
  %v366 = vmul.f32 %v356, %v365
  %368 = vset.pattern.permute.xlu0 0
  %369 = vperm.xlu0 %368, %v364
  %v370 = vpop.permute.xlu0 %369
  %373 = vset.pattern.permute.xlu0 0
  %374 = vperm.xlu0 %373, %v366
  %v375 = vpop.permute.xlu0 %374
  %v377 = vmul.f32 %v370, %v322
  %v378 = vmul.f32 %v375, %v327
  %379 = vset.pattern.permute.xlu0 1
  %380 = vperm.xlu0 %379, %v364
  %v381 = vpop.permute.xlu0 %380
  %383 = vset.pattern.permute.xlu0 1
  %384 = vperm.xlu0 %383, %v366
  %v385 = vpop.permute.xlu0 %384
  %v387 = vmul.f32 %v381, %v322
  %v388 = vmul.f32 %v385, %v327
  %391 = vrot.lane.b32.xlu0 %v387, 112
  %v392 = vpop.permute.xlu0 %391
  %393 = vrot.lane.b32.xlu0 %v388, 112
  %v394 = vpop.permute.xlu0 %393
  %v397 = vadd.f32 %v377, %v392
  %v398 = vadd.f32 %v378, %v394
  %399 = vset.pattern.permute.xlu0 2
  %400 = vperm.xlu0 %399, %v364
  %v401 = vpop.permute.xlu0 %400
  %403 = vset.pattern.permute.xlu0 2
  %404 = vperm.xlu0 %403, %v366
  %v405 = vpop.permute.xlu0 %404
  %v407 = vmul.f32 %v401, %v322
  %v408 = vmul.f32 %v405, %v327
  %411 = vrot.lane.b32.xlu0 %v407, 96
  %v412 = vpop.permute.xlu0 %411
  %413 = vrot.lane.b32.xlu0 %v408, 96
  %v414 = vpop.permute.xlu0 %413
  %v417 = vadd.f32 %v397, %v412
  %v418 = vadd.f32 %v398, %v414
  %419 = vset.pattern.permute.xlu0 3
  %420 = vperm.xlu0 %419, %v364
  %v421 = vpop.permute.xlu0 %420
  %423 = vset.pattern.permute.xlu0 3
  %424 = vperm.xlu0 %423, %v366
  %v425 = vpop.permute.xlu0 %424
  %v427 = vmul.f32 %v421, %v322
  %v428 = vmul.f32 %v425, %v327
  %431 = vrot.lane.b32.xlu0 %v427, 80
  %v432 = vpop.permute.xlu0 %431
  %433 = vrot.lane.b32.xlu0 %v428, 80
  %v434 = vpop.permute.xlu0 %433
  %v437 = vadd.f32 %v417, %v432
  %v438 = vadd.f32 %v418, %v434
  %v439 = vmul.f32 %v330, %v239
  %v440 = vmul.f32 %v331, %v241
  %443 = vrot.lane.b32.xlu0 %v228, 4
  %v444 = vpop.permute.xlu0 %443
  %445 = vrot.lane.b32.xlu0 %v233, 4
  %v446 = vpop.permute.xlu0 %445
  %v449 = vadd.f32 %v439, %v444
  %v450 = vadd.f32 %v440, %v446
  %vm451 = vcmask 64544
  %v452 = vsel %vm451, %v449, -inf
  %453 = vmax.xlane.f32.xlu0 %v452
  %v454 = vpop.xlane.xlu0 %453
  %v455 = vsel %vm451, %v450, -inf
  %456 = vmax.xlane.f32.xlu0 %v455
  %v457 = vpop.xlane.xlu0 %456
  %v458 = vsub.f32 %v449, %v454
  %v459 = vsub.f32 %v450, %v457
  %v460 = vmul.f32 %v458, 1.442695
  %v461 = vpow.pop %v460
  %v462 = vmul.f32 %v459, 1.442695
  %v463 = vpow.pop %v462
  %466 = vrot.lane.b32.xlu0 %v461, 124
  %v467 = vpop.permute.xlu0 %466
  %468 = vrot.lane.b32.xlu0 %v463, 124
  %v469 = vpop.permute.xlu0 %468
  %v472 = vsel %vm344, %v467, 0.0
  %473 = vadd.xlane.f32.xlu0 %v472
  %v474 = vpop.xlane.xlu0 %473
  %v475 = vsel %vm344, %v469, 0.0
  %476 = vadd.xlane.f32.xlu0 %v475
  %v477 = vpop.xlane.xlu0 %476
  %v478 = vrcp.pop %v474
  %v479 = vmul.f32 %v461, %v478
  %v480 = vrcp.pop %v477
  %v481 = vmul.f32 %v463, %v480
  %483 = vset.pattern.permute.xlu0 4
  %484 = vperm.xlu0 %483, %v479
  %v485 = vpop.permute.xlu0 %484
  %488 = vset.pattern.permute.xlu0 4
  %489 = vperm.xlu0 %488, %v481
  %v490 = vpop.permute.xlu0 %489
  %v492 = vmul.f32 %v485, %v322
  %v493 = vmul.f32 %v490, %v327
  %494 = vset.pattern.permute.xlu0 5
  %495 = vperm.xlu0 %494, %v479
  %v496 = vpop.permute.xlu0 %495
  %498 = vset.pattern.permute.xlu0 5
  %499 = vperm.xlu0 %498, %v481
  %v500 = vpop.permute.xlu0 %499
  %v502 = vmul.f32 %v496, %v322
  %v503 = vmul.f32 %v500, %v327
  %506 = vrot.lane.b32.xlu0 %v502, 112
  %v507 = vpop.permute.xlu0 %506
  %508 = vrot.lane.b32.xlu0 %v503, 112
  %v509 = vpop.permute.xlu0 %508
  %v512 = vadd.f32 %v492, %v507
  %v513 = vadd.f32 %v493, %v509
  %514 = vset.pattern.permute.xlu0 6
  %515 = vperm.xlu0 %514, %v479
  %v516 = vpop.permute.xlu0 %515
  %518 = vset.pattern.permute.xlu0 6
  %519 = vperm.xlu0 %518, %v481
  %v520 = vpop.permute.xlu0 %519
  %v522 = vmul.f32 %v516, %v322
  %v523 = vmul.f32 %v520, %v327
  %526 = vrot.lane.b32.xlu0 %v522, 96
  %v527 = vpop.permute.xlu0 %526
  %528 = vrot.lane.b32.xlu0 %v523, 96
  %v529 = vpop.permute.xlu0 %528
  %v532 = vadd.f32 %v512, %v527
  %v533 = vadd.f32 %v513, %v529
  %534 = vset.pattern.permute.xlu0 7
  %535 = vperm.xlu0 %534, %v479
  %v536 = vpop.permute.xlu0 %535
  %538 = vset.pattern.permute.xlu0 7
  %539 = vperm.xlu0 %538, %v481
  %v540 = vpop.permute.xlu0 %539
  %v542 = vmul.f32 %v536, %v322
  %v543 = vmul.f32 %v540, %v327
  %546 = vrot.lane.b32.xlu0 %v542, 80
  %v547 = vpop.permute.xlu0 %546
  %548 = vrot.lane.b32.xlu0 %v543, 80
  %v549 = vpop.permute.xlu0 %548
  %v552 = vadd.f32 %v532, %v547
  %v553 = vadd.f32 %v533, %v549
  %554 = vrot.lane.b32.xlu0 %v239, 4
  %v555 = vpop.permute.xlu0 %554
  %556 = vrot.lane.b32.xlu0 %v241, 4
  %v557 = vpop.permute.xlu0 %556
  %v560 = vmul.f32 %v330, %v555
  %v561 = vmul.f32 %v331, %v557
  %562 = vrot.lane.b32.xlu0 %v228, 8
  %v563 = vpop.permute.xlu0 %562
  %564 = vrot.lane.b32.xlu0 %v233, 8
  %v565 = vpop.permute.xlu0 %564
  %v568 = vadd.f32 %v560, %v563
  %v569 = vadd.f32 %v561, %v565
  %vm570 = vcmask 97344
  %v571 = vsel %vm570, %v568, -inf
  %572 = vmax.xlane.f32.xlu0 %v571
  %v573 = vpop.xlane.xlu0 %572
  %v574 = vsel %vm570, %v569, -inf
  %575 = vmax.xlane.f32.xlu0 %v574
  %v576 = vpop.xlane.xlu0 %575
  %v577 = vsub.f32 %v568, %v573
  %v578 = vsub.f32 %v569, %v576
  %v579 = vmul.f32 %v577, 1.442695
  %v580 = vpow.pop %v579
  %v581 = vmul.f32 %v578, 1.442695
  %v582 = vpow.pop %v581
  %585 = vrot.lane.b32.xlu0 %v580, 120
  %v586 = vpop.permute.xlu0 %585
  %587 = vrot.lane.b32.xlu0 %v582, 120
  %v588 = vpop.permute.xlu0 %587
  %v591 = vsel %vm344, %v586, 0.0
  %592 = vadd.xlane.f32.xlu0 %v591
  %v593 = vpop.xlane.xlu0 %592
  %v594 = vsel %vm344, %v588, 0.0
  %595 = vadd.xlane.f32.xlu0 %v594
  %v596 = vpop.xlane.xlu0 %595
  %v597 = vrcp.pop %v593
  %v598 = vmul.f32 %v580, %v597
  %v599 = vrcp.pop %v596
  %v600 = vmul.f32 %v582, %v599
  %602 = vset.pattern.permute.xlu0 8
  %603 = vperm.xlu0 %602, %v598
  %v604 = vpop.permute.xlu0 %603
  %607 = vset.pattern.permute.xlu0 8
  %608 = vperm.xlu0 %607, %v600
  %v609 = vpop.permute.xlu0 %608
  %v611 = vmul.f32 %v604, %v322
  %v612 = vmul.f32 %v609, %v327
  %613 = vset.pattern.permute.xlu0 9
  %614 = vperm.xlu0 %613, %v598
  %v615 = vpop.permute.xlu0 %614
  %617 = vset.pattern.permute.xlu0 9
  %618 = vperm.xlu0 %617, %v600
  %v619 = vpop.permute.xlu0 %618
  %v621 = vmul.f32 %v615, %v322
  %v622 = vmul.f32 %v619, %v327
  %625 = vrot.lane.b32.xlu0 %v621, 112
  %v626 = vpop.permute.xlu0 %625
  %627 = vrot.lane.b32.xlu0 %v622, 112
  %v628 = vpop.permute.xlu0 %627
  %v631 = vadd.f32 %v611, %v626
  %v632 = vadd.f32 %v612, %v628
  %633 = vset.pattern.permute.xlu0 10
  %634 = vperm.xlu0 %633, %v598
  %v635 = vpop.permute.xlu0 %634
  %637 = vset.pattern.permute.xlu0 10
  %638 = vperm.xlu0 %637, %v600
  %v639 = vpop.permute.xlu0 %638
  %v641 = vmul.f32 %v635, %v322
  %v642 = vmul.f32 %v639, %v327
  %645 = vrot.lane.b32.xlu0 %v641, 96
  %v646 = vpop.permute.xlu0 %645
  %647 = vrot.lane.b32.xlu0 %v642, 96
  %v648 = vpop.permute.xlu0 %647
  %v651 = vadd.f32 %v631, %v646
  %v652 = vadd.f32 %v632, %v648
  %653 = vset.pattern.permute.xlu0 11
  %654 = vperm.xlu0 %653, %v598
  %v655 = vpop.permute.xlu0 %654
  %657 = vset.pattern.permute.xlu0 11
  %658 = vperm.xlu0 %657, %v600
  %v659 = vpop.permute.xlu0 %658
  %v661 = vmul.f32 %v655, %v322
  %v662 = vmul.f32 %v659, %v327
  %665 = vrot.lane.b32.xlu0 %v661, 80
  %v666 = vpop.permute.xlu0 %665
  %667 = vrot.lane.b32.xlu0 %v662, 80
  %v668 = vpop.permute.xlu0 %667
  %v671 = vadd.f32 %v651, %v666
  %v672 = vadd.f32 %v652, %v668
  %673 = vrot.lane.b32.xlu0 %v239, 8
  %v674 = vpop.permute.xlu0 %673
  %675 = vrot.lane.b32.xlu0 %v241, 8
  %v676 = vpop.permute.xlu0 %675
  %v679 = vmul.f32 %v330, %v674
  %v680 = vmul.f32 %v331, %v676
  %681 = vrot.lane.b32.xlu0 %v228, 12
  %v682 = vpop.permute.xlu0 %681
  %683 = vrot.lane.b32.xlu0 %v233, 12
  %v684 = vpop.permute.xlu0 %683
  %v687 = vadd.f32 %v679, %v682
  %v688 = vadd.f32 %v680, %v684
  %vm689 = vcmask 130144
  %v690 = vsel %vm689, %v687, -inf
  %691 = vmax.xlane.f32.xlu0 %v690
  %v692 = vpop.xlane.xlu0 %691
  %v693 = vsel %vm689, %v688, -inf
  %694 = vmax.xlane.f32.xlu0 %v693
  %v695 = vpop.xlane.xlu0 %694
  %v696 = vsub.f32 %v687, %v692
  %v697 = vsub.f32 %v688, %v695
  %v698 = vmul.f32 %v696, 1.442695
  %v699 = vpow.pop %v698
  %v700 = vmul.f32 %v697, 1.442695
  %v701 = vpow.pop %v700
  %704 = vrot.lane.b32.xlu0 %v699, 116
  %v705 = vpop.permute.xlu0 %704
  %706 = vrot.lane.b32.xlu0 %v701, 116
  %v707 = vpop.permute.xlu0 %706
  %v710 = vsel %vm344, %v705, 0.0
  %711 = vadd.xlane.f32.xlu0 %v710
  %v712 = vpop.xlane.xlu0 %711
  %v713 = vsel %vm344, %v707, 0.0
  %714 = vadd.xlane.f32.xlu0 %v713
  %v715 = vpop.xlane.xlu0 %714
  %v716 = vrcp.pop %v712
  %v717 = vmul.f32 %v699, %v716
  %v718 = vrcp.pop %v715
  %v719 = vmul.f32 %v701, %v718
  %721 = vset.pattern.permute.xlu0 12
  %722 = vperm.xlu0 %721, %v717
  %v723 = vpop.permute.xlu0 %722
  %726 = vset.pattern.permute.xlu0 12
  %727 = vperm.xlu0 %726, %v719
  %v728 = vpop.permute.xlu0 %727
  %v730 = vmul.f32 %v723, %v322
  %v731 = vmul.f32 %v728, %v327
  %732 = vset.pattern.permute.xlu0 13
  %733 = vperm.xlu0 %732, %v717
  %v734 = vpop.permute.xlu0 %733
  %736 = vset.pattern.permute.xlu0 13
  %737 = vperm.xlu0 %736, %v719
  %v738 = vpop.permute.xlu0 %737
  %v740 = vmul.f32 %v734, %v322
  %v741 = vmul.f32 %v738, %v327
  %744 = vrot.lane.b32.xlu0 %v740, 112
  %v745 = vpop.permute.xlu0 %744
  %746 = vrot.lane.b32.xlu0 %v741, 112
  %v747 = vpop.permute.xlu0 %746
  %v750 = vadd.f32 %v730, %v745
  %v751 = vadd.f32 %v731, %v747
  %752 = vset.pattern.permute.xlu0 14
  %753 = vperm.xlu0 %752, %v717
  %v754 = vpop.permute.xlu0 %753
  %756 = vset.pattern.permute.xlu0 14
  %757 = vperm.xlu0 %756, %v719
  %v758 = vpop.permute.xlu0 %757
  %v760 = vmul.f32 %v754, %v322
  %v761 = vmul.f32 %v758, %v327
  %764 = vrot.lane.b32.xlu0 %v760, 96
  %v765 = vpop.permute.xlu0 %764
  %766 = vrot.lane.b32.xlu0 %v761, 96
  %v767 = vpop.permute.xlu0 %766
  %v770 = vadd.f32 %v750, %v765
  %v771 = vadd.f32 %v751, %v767
  %772 = vset.pattern.permute.xlu0 15
  %773 = vperm.xlu0 %772, %v717
  %v774 = vpop.permute.xlu0 %773
  %776 = vset.pattern.permute.xlu0 15
  %777 = vperm.xlu0 %776, %v719
  %v778 = vpop.permute.xlu0 %777
  %v780 = vmul.f32 %v774, %v322
  %v781 = vmul.f32 %v778, %v327
  %784 = vrot.lane.b32.xlu0 %v780, 80
  %v785 = vpop.permute.xlu0 %784
  %786 = vrot.lane.b32.xlu0 %v781, 80
  %v787 = vpop.permute.xlu0 %786
  %v790 = vadd.f32 %v770, %v785
  %v791 = vadd.f32 %v771, %v787
  %794 = vrot.lane.b32.xlu0 %v552, 16
  %v795 = vpop.permute.xlu0 %794
  %796 = vrot.lane.b32.xlu0 %v553, 16
  %v797 = vpop.permute.xlu0 %796
  %802 = vrot.lane.b32.xlu0 %v671, 32
  %v803 = vpop.permute.xlu0 %802
  %804 = vrot.lane.b32.xlu0 %v672, 32
  %v805 = vpop.permute.xlu0 %804
  %810 = vrot.lane.b32.xlu0 %v790, 48
  %v811 = vpop.permute.xlu0 %810
  %812 = vrot.lane.b32.xlu0 %v791, 48
  %v813 = vpop.permute.xlu0 %812
  %v816 = vsel %vm147, %v437, %v795
  %v817 = vsel %vm147, %v438, %v797
  %v818 = vsel %vm248, %v816, %v803
  %v819 = vsel %vm248, %v817, %v805
  %vm820 = vcmask 392192
  %v821 = vsel %vm820, %v818, %v811
  %v822 = vsel %vm820, %v819, %v813
  %vm823 = vcmask 523264
  %824 = vst.msk [vmem:[%s5] sm:$0xff] %vm823, %v821
  %825 = vst.msk [vmem:[%s5 + $0x8] sm:$0xff] %vm823, %v822
  // Predicated region
  $region22: #{stochastic_basis_cust_linear.1} parent=0 // pred_check
    _
  $region23: #{stochastic_basis_cust_linear.1} parent=0 // pred_check_branch
    %827 = sbr.rel (0) target = $region25
  $region24: #{stochastic_basis_cust_linear.1} parent=0 // pred_region
    _
  $region25: #{stochastic_basis_cust_linear.1} parent=0 // pred_fallthru
    _
  // Predicated region
  $region26: #{stochastic_basis_cust_linear.1} parent=0 // pred_check
    _
  $region27: #{stochastic_basis_cust_linear.1} parent=0 // pred_check_branch
    %829 = sbr.rel (0) target = $region29
  $region28: #{stochastic_basis_cust_linear.1} parent=0 // pred_region
    _
  $region29: #{stochastic_basis_cust_linear.1} parent=0 // pred_fallthru
    _

</llo_original>
